<compile_context>
chip_gen: v7x
topology: tpu7x:2x2x1
jax: 0.10.0
libtpu: 0.0.40
codegen_flags: <defaults>
</compile_context>

<pallas_src>
import functools

import jax
import jax.numpy as jnp
from jax.experimental import pallas as pl
from jax.experimental.pallas import tpu as pltpu


def _round_down(x, m):
    return (x // m) * m


def _round_up(x, m):
    return -(-x // m) * m


def _pool_kernel(e_ref, m_ref, aux_ref, o_ref, acc_ref, *, method: str,
                 seq_len: int, ts: int, ragged: bool):
    """Grid = (batch blocks, seq blocks).  Seq axis is the reduction ("arbitrary").

    e_ref:   (TB, TS, H)  embeddings tile (embeds dtype)
    m_ref:   (TB, TS, 1)  mask tile in embeds dtype (1.0 valid / 0.0 padded)
    aux_ref: (TB, 1)      f32 per-row finalizer (mean: 1/clamp(cnt,1); max: cnt)
    o_ref:   (TB, H)      pooled output tile (resident across the seq axis)
    acc_ref: (TB, H)      f32 accumulator scratch (sum or running max)
    """
    s_idx = pl.program_id(1)

    @pl.when(s_idx == 0)
    def _init():
        if method == "mean":
            acc_ref[...] = jnp.zeros(acc_ref.shape, acc_ref.dtype)
        else:
            acc_ref[...] = jnp.full(acc_ref.shape, -jnp.inf, acc_ref.dtype)

    e = e_ref[...]                                  # (TB, TS, H)
    m = m_ref[...]                                  # (TB, TS, 1)

    if ragged:
        # The last seq tile can read OOB rows (possibly NaN garbage): keep a
        # position-guarded select.  This branch is compiled only when TS does
        # not divide S.
        pos = s_idx * ts + jax.lax.broadcasted_iota(jnp.int32, m.shape, 1)
        valid = jnp.logical_and(m > 0, pos < seq_len)
        if method == "mean":
            contrib = jnp.where(valid, e, jnp.zeros((), e.dtype))
            acc_ref[...] += jnp.sum(contrib.astype(jnp.float32), axis=1)
        else:
            blk = jnp.where(valid, e.astype(jnp.float32), -jnp.inf)
            acc_ref[...] = jnp.maximum(acc_ref[...], jnp.max(blk, axis=1))
    else:
        if method == "mean":
            # mask is exactly 0/1 in the embeds dtype, so e*m is exact; widen to
            # f32 only for accumulation (mul + cvt + add per loaded vreg).
            acc_ref[...] += jnp.sum((e * m).astype(jnp.float32), axis=1)
        else:
            blk = jnp.where(m > 0, e.astype(jnp.float32), -jnp.inf)
            acc_ref[...] = jnp.maximum(acc_ref[...], jnp.max(blk, axis=1))

    @pl.when(s_idx == pl.num_programs(1) - 1)
    def _finalize():
        aux = aux_ref[...]                          # (TB, 1) f32
        if method == "mean":
            o_ref[...] = (acc_ref[...] * aux).astype(o_ref.dtype)
        else:
            o_ref[...] = jnp.where(aux > 0.0, acc_ref[...], 0.0).astype(o_ref.dtype)


def _choose_tiles(B, S, H, itemsize, target_bytes=16 * 1024 * 1024):
    """Pick (TB, TS) so one (embeds + padded-mask) block is ~target_bytes.

    Layout legality: TB must equal B or be a multiple of 8 (output block is
    (TB, H) and aux block is (TB, 1)); TS must equal S or be a multiple of 8.
    The mask tile pads its unit last dim to 128 lanes in VMEM, so it is charged
    as 128 extra "lanes" per token alongside the embeds block.
    """
    bytes_per_token = (_round_up(H, 128) + 128) * itemsize
    per_row = S * bytes_per_token
    rows_fit = max(1, target_bytes // max(1, per_row))

    if rows_fit >= B:
        tb, ts = B, S
    elif rows_fit >= 8:
        tb, ts = _round_down(rows_fit, 8), S
    else:
        # One full (S, H) row exceeds the budget: tile the sequence axis too.
        tb = B if B < 8 else 8
        ts = _round_down(max(8, target_bytes // max(1, tb * bytes_per_token)), 8)
        ts = min(ts, S)
        if ts < S and S % ts != 0:
            # Prefer a TS that divides S (kills the ragged-edge guard) as long
            # as it does not shrink the block by more than ~2x.
            for cand in range(ts, max(8, ts // 2) - 1, -8):
                if S % cand == 0:
                    ts = cand
                    break

    # Keep both TensorCores busy on the "parallel" batch axis (v7x megacore):
    # never collapse the batch axis to a single block for large batches.
    if B >= 16:
        tb = min(tb, max(8, _round_down(B // 4, 8)))

    return tb, ts


def pool_layer(embeds: jax.Array, mask: jax.Array, method: str = "mean") -> jax.Array:
    """Masked pooling over the seq_len axis.

    Args:
        embeds: [..., S, H] float array.
        mask:   [..., S] bool array.
        method: 'mean' or 'max'.

    Returns:
        [..., H] pooled embeddings (same dtype as embeds).
    """
    if method not in ("mean", "max"):
        raise ValueError("Method must be either 'mean' or 'max'.")

    *lead, S, H = embeds.shape
    B = 1
    for d in lead:
        B *= d
    embeds3 = embeds.reshape(B, S, H)
    mask2 = mask.reshape(B, S)

    # Mask in the embeds dtype (smaller 128-lane-padded VMEM tile), and per-row
    # finalizer computed once on the XLA side (only B*S bools of extra traffic).
    mask3 = mask2.astype(embeds.dtype)[..., None]                        # (B, S, 1)
    cnt = jnp.sum(mask2, axis=-1, keepdims=True).astype(jnp.float32)     # (B, 1)
    if method == "mean":
        aux = 1.0 / jnp.maximum(cnt, 1.0)
    else:
        aux = cnt

    it = embeds.dtype.itemsize
    TB, TS = _choose_tiles(B, S, H, it)
    grid = (pl.cdiv(B, TB), pl.cdiv(S, TS))
    ragged = (S % TS) != 0

    # VMEM budget from the actual padded buffer sizes (double-buffered inputs +
    # output, f32 accumulator, headroom), clamped to a sane range.
    eblk = TB * _round_up(TS, 8) * _round_up(H, 128) * it
    mblk = TB * _round_up(TS, 8) * 128 * it
    auxblk = _round_up(TB, 8) * 128 * 4
    oblk = _round_up(TB, 8) * _round_up(H, 128) * it
    accblk = _round_up(TB, 8) * _round_up(H, 128) * 4
    vmem_limit = 2 * (eblk + mblk + auxblk + oblk) + accblk + (4 << 20)
    vmem_limit = int(min(max(vmem_limit, 32 << 20), 100 << 20))

    out = pl.pallas_call(
        functools.partial(_pool_kernel, method=method, seq_len=S, ts=TS, ragged=ragged),
        out_shape=jax.ShapeDtypeStruct((B, H), embeds.dtype),
        grid=grid,
        in_specs=[
            pl.BlockSpec((TB, TS, H), lambda b, s: (b, s, 0)),
            pl.BlockSpec((TB, TS, 1), lambda b, s: (b, s, 0)),
            pl.BlockSpec((TB, 1), lambda b, s: (b, 0)),
        ],
        out_specs=pl.BlockSpec((TB, H), lambda b, s: (b, 0)),
        scratch_shapes=[
            pltpu.VMEM((TB, H), jnp.float32),   # sum / running-max accumulator
        ],
        compiler_params=pltpu.CompilerParams(
            dimension_semantics=("parallel", "arbitrary"),
            vmem_limit_bytes=vmem_limit,
        ),
        cost_estimate=pl.CostEstimate(
            flops=2 * B * S * H,
            transcendentals=0,
            bytes_accessed=(embeds3.size * it + mask3.size * it
                            + aux.size * 4 + B * H * it),
        ),
    )(embeds3, mask3, aux)

    return out.reshape(*lead, H)


def _reference(embeds, mask, method):
    m = mask[..., None]
    if method == "mean":
        e = jnp.where(m, embeds, 0.0)
        s = jnp.sum(e, axis=-2)
        cnt = jnp.maximum(jnp.sum(m.astype(embeds.dtype), axis=-2), 1.0)
        return s / cnt
    else:
        e = jnp.where(m, embeds, jnp.finfo(embeds.dtype).min)
        mx = jnp.max(e, axis=-2)
        return jnp.where(jnp.any(m, axis=-2), mx, jnp.zeros_like(mx))


if __name__ == "__main__":
    B, S, H = 2, 8, 32
    key = jax.random.PRNGKey(0)
    k_e, k_m = jax.random.split(key)
    embeds = jax.random.normal(k_e, (B, S, H), dtype=jnp.float32)
    # Deterministic mask with some padded positions (and at least one valid row).
    mask = jax.random.bernoulli(k_m, p=0.7, shape=(B, S))
    mask = mask.at[:, 0].set(True)
    # Variant with a fully-padded row (exercises the empty-row / zero-output path).
    mask_empty = mask.at[1].set(False)

    ok = True
    for m in (mask, mask_empty):
        for method in ("mean", "max"):
            out = jax.block_until_ready(pool_layer(embeds, m, method=method))
            ref = _reference(embeds, m, method)
            if not jnp.allclose(out, ref, atol=1e-5, rtol=1e-5):
                ok = False

    if ok:
        print("KERNEL_OK")
</pallas_src>

<mosaic_0001>
module attributes {stable_mosaic.version = 11 : i64} {
  func.func @_pool_kernel(%arg0: i32, %arg1: i32, %arg2: memref<2x8x32xf32, #tpu.memory_space<vmem>>, %arg3: memref<2x8x1xf32, #tpu.memory_space<vmem>>, %arg4: memref<2x1xf32, #tpu.memory_space<vmem>>, %arg5: memref<2x32xf32, #tpu.memory_space<vmem>>, %arg6: memref<2x32xf32, #tpu.memory_space<vmem>>) attributes {dimension_semantics = [#tpu.dimension_semantics<parallel>, #tpu.dimension_semantics<arbitrary>], iteration_bounds = array<i64: 1, 1>, scalar_prefetch = 0 : i64, scratch_operands = 1 : i64, tpu.core_type = #tpu.core_type<tc>, window_params = [{transform_indices = @transform_0, window_bounds = array<i64: 2, 8, 32>}, {transform_indices = @transform_1, window_bounds = array<i64: 2, 8, 1>}, {transform_indices = @transform_2, window_bounds = array<i64: 2, 1>}, {transform_indices = @transform_3, window_bounds = array<i64: 2, 32>}]} {
    %c0_i32 = arith.constant 0 : i32
    %0 = arith.cmpi eq, %arg1, %c0_i32 : i32
    %1 = arith.extui %0 : i1 to i32
    %c0_i32_0 = arith.constant 0 : i32
    %2 = arith.cmpi ne, %1, %c0_i32_0 : i32
    scf.if %2 {
      %cst_12 = arith.constant 0.000000e+00 : f32
      %14 = vector.broadcast %cst_12 : f32 to vector<2x32xf32>
      %c0_13 = arith.constant 0 : index
      %c0_14 = arith.constant 0 : index
      %15 = vector.load %arg6[%c0_13, %c0_14] : memref<2x32xf32, #tpu.memory_space<vmem>>, vector<2x32xf32>
      tpu.vector_store %arg6[%c0_13, %c0_14], %14 {strides = array<i32>} : memref<2x32xf32, #tpu.memory_space<vmem>>, vector<2x32xf32>,
    } else {
    }
    %c0 = arith.constant 0 : index
    %c0_1 = arith.constant 0 : index
    %c0_2 = arith.constant 0 : index
    %3 = vector.load %arg2[%c0, %c0_1, %c0_2] : memref<2x8x32xf32, #tpu.memory_space<vmem>>, vector<2x8x32xf32>
    %c0_3 = arith.constant 0 : index
    %c0_4 = arith.constant 0 : index
    %c0_5 = arith.constant 0 : index
    %4 = vector.load %arg3[%c0_3, %c0_4, %c0_5] : memref<2x8x1xf32, #tpu.memory_space<vmem>>, vector<2x8x1xf32>
    %c0_6 = arith.constant 0 : index
    %c0_7 = arith.constant 0 : index
    %5 = vector.load %arg6[%c0_6, %c0_7] : memref<2x32xf32, #tpu.memory_space<vmem>>, vector<2x32xf32>
    %6 = vector.broadcast %4 : vector<2x8x1xf32> to vector<2x8x32xf32>
    %7 = arith.mulf %3, %6 : vector<2x8x32xf32>
    %cst = arith.constant dense<0.000000e+00> : vector<2x32xf32>
    %8 = vector.multi_reduction <add>, %7, %cst [1] : vector<2x8x32xf32> to vector<2x32xf32>
    %9 = arith.addf %5, %8 : vector<2x32xf32>
    %c0_8 = arith.constant 0 : index
    %c0_9 = arith.constant 0 : index
    %10 = vector.load %arg6[%c0_8, %c0_9] : memref<2x32xf32, #tpu.memory_space<vmem>>, vector<2x32xf32>
    tpu.vector_store %arg6[%c0_8, %c0_9], %9 {strides = array<i32>} : memref<2x32xf32, #tpu.memory_space<vmem>>, vector<2x32xf32>,
    %c0_i32_10 = arith.constant 0 : i32
    %11 = arith.cmpi eq, %arg1, %c0_i32_10 : i32
    %12 = arith.extui %11 : i1 to i32
    %c0_i32_11 = arith.constant 0 : i32
    %13 = arith.cmpi ne, %12, %c0_i32_11 : i32
    scf.if %13 {
      %c0_12 = arith.constant 0 : index
      %c0_13 = arith.constant 0 : index
      %14 = vector.load %arg4[%c0_12, %c0_13] : memref<2x1xf32, #tpu.memory_space<vmem>>, vector<2x1xf32>
      %c0_14 = arith.constant 0 : index
      %c0_15 = arith.constant 0 : index
      %15 = vector.load %arg6[%c0_14, %c0_15] : memref<2x32xf32, #tpu.memory_space<vmem>>, vector<2x32xf32>
      %16 = vector.broadcast %14 : vector<2x1xf32> to vector<2x32xf32>
      %17 = arith.mulf %15, %16 : vector<2x32xf32>
      %c0_16 = arith.constant 0 : index
      %c0_17 = arith.constant 0 : index
      %18 = vector.load %arg5[%c0_16, %c0_17] : memref<2x32xf32, #tpu.memory_space<vmem>>, vector<2x32xf32>
      tpu.vector_store %arg5[%c0_16, %c0_17], %17 {strides = array<i32>} : memref<2x32xf32, #tpu.memory_space<vmem>>, vector<2x32xf32>,
    } else {
    }
    return
  }
  func.func @transform_0(%arg0: i32, %arg1: i32) -> (i32, i32, i32) {
    %c0_i32 = arith.constant 0 : i32
    %c0_i32_0 = arith.constant 0 : i32
    return %arg0, %arg1, %c0_i32 : i32, i32, i32
  }
  func.func @transform_1(%arg0: i32, %arg1: i32) -> (i32, i32, i32) {
    %c0_i32 = arith.constant 0 : i32
    %c0_i32_0 = arith.constant 0 : i32
    return %arg0, %arg1, %c0_i32 : i32, i32, i32
  }
  func.func @transform_2(%arg0: i32, %arg1: i32) -> (i32, i32) {
    %c0_i32 = arith.constant 0 : i32
    %c0_i32_0 = arith.constant 0 : i32
    return %arg0, %c0_i32 : i32, i32
  }
  func.func @transform_3(%arg0: i32, %arg1: i32) -> (i32, i32) {
    %c0_i32 = arith.constant 0 : i32
    %c0_i32_0 = arith.constant 0 : i32
    return %arg0, %c0_i32 : i32, i32
  }
}

</mosaic_0001>

<llo_original>
// kernel: tpu_custom_call.1
$region0: #{tpu_custom_call.1}
  #allocation0 [shape = 'u32[]', space=smem, size = 0x4, offset = 0x4, fixed_abs, tag = 'smem constant byte address 0x4 - core index']
  #allocation1 [shape = 'u32[144,128]{1,0:T(1,128)}', space=vmem, size = 0x12000, scoped, tag = 'internal scratch']
  #allocation2 [shape = 'f32[2,32]{1,0:T(2,128)}', space=vmem, size = 0x400, scoped, tag = 'scratch operand']
  %s0 = inlined_call_operand.vmem [shape: f32[2,8,32], index: 0, kind: input, shape index: {}]
  %s1 = inlined_call_operand.vmem [shape: f32[2,8,1], index: 1, kind: input, shape index: {}]
  %s2 = inlined_call_operand.vmem [shape: f32[2,1], index: 2, kind: input, shape index: {}]
  %s3 = inlined_call_operand.hbm [shape: f32[2,32], index: 3, kind: output, shape index: {}]
  %s4 = sld [smem:[#allocation0]]
  $region30: #{tpu_custom_call.1} parent=0
    _
  %s6 = ssub.s32 1, %s4
  %s7 = scalar_select 0, %s6, %s4
  $region1: #{tpu_custom_call.1} parent=0
    #allocation3 [shape = 'u8[1024]{0}', space=vmem, size = 0x400, scoped, tag = 'output window, operand 0, single buffered']
    #allocation4 [shape = 's32[1]{0}', space=sflag, size = 0x4, scoped, tag = 'scoped memory for tpu_custom_call.1']
    %8 = vsyncpa [#allocation4], 0
    // Predicated region
    $region2: #{tpu_custom_call.1} parent=1 // pred_check
      _
    $region3: #{tpu_custom_call.1} parent=1 // pred_check_branch
      %10 = sbr.rel (0) target = $region5
    $region4: #{tpu_custom_call.1} parent=1 // pred_region
      _
    $region5: #{tpu_custom_call.1} parent=1 // pred_fallthru
      _
    // Predicated region
    $region6: #{tpu_custom_call.1} parent=1 // pred_check
      _
    $region7: #{tpu_custom_call.1} parent=1 // pred_check_branch
      %12 = sbr.rel (0) target = $region9
    $region8: #{tpu_custom_call.1} parent=1 // pred_region
      _
    $region9: #{tpu_custom_call.1} parent=1 // pred_fallthru
      _
    // Predicated region
    $region10: #{tpu_custom_call.1} parent=1 // pred_check
      _
    $region11: #{tpu_custom_call.1} parent=1 // pred_check_branch
      %14 = sbr.rel (0) target = $region13
    $region12: #{tpu_custom_call.1} parent=1 // pred_region
      _
    $region13: #{tpu_custom_call.1} parent=1 // pred_fallthru
      _
    %p15 = scmp.eq.s32.totalorder 0, 0
    // Predicated region
    $region14: #{tpu_custom_call.1} parent=1 // pred_check
      %p16 = pneg %p15
    $region15: #{tpu_custom_call.1} parent=1 // pred_check_branch
      %18 = sbr.rel (%p16) target = $region17
    $region16: #{tpu_custom_call.1} parent=1 // pred_region
      %vm19 = vcmask 254976
      %20 = vst.msk [vmem:[#allocation2] sm:$0x3] %vm19, 0.0
    $region17: #{tpu_custom_call.1} parent=1 // pred_fallthru
      _
    %v21 = vld [vmem:[%s0] sm:$0xff]
    %v22 = vld [vmem:[%s0 + $0x8] sm:$0xff]
    %v23 = vld [vmem:[%s1] sm:$0xff]
    %v24 = vld [vmem:[%s1 + $0x8] sm:$0xff]
    %v25 = vld [vmem:[#allocation2] sm:$0x3]
    %27 = vset.pattern.permute.xlu0 0
    %28 = vperm.xlu0 %27, %v23
    %v29 = vpop.permute.xlu0 %28
    %32 = vset.pattern.permute.xlu0 0
    %33 = vperm.xlu0 %32, %v24
    %v34 = vpop.permute.xlu0 %33
    %v36 = vmul.f32 %v21, %v29
    %v37 = vmul.f32 %v22, %v34
    %vm38 = vcmask 261120
    %v39 = vsel %vm38, %v36, 0.0
    %v40 = vrot.slane %v39, 4
    %v41 = vadd.f32 %v39, %v40
    %v42 = vrot.slane %v41, 2
    %v43 = vadd.f32 %v41, %v42
    %v44 = vrot.slane %v43, 1
    %v45 = vadd.f32 %v43, %v44
    %v46 = vsel %vm38, %v37, 0.0
    %v47 = vrot.slane %v46, 4
    %v48 = vadd.f32 %v46, %v47
    %v49 = vrot.slane %v48, 2
    %v50 = vadd.f32 %v48, %v49
    %v51 = vrot.slane %v50, 1
    %v52 = vadd.f32 %v50, %v51
    %vm55 = vcmask 1041409
    %v56 = vsel %vm55, %v52, %v45
    %v58 = vadd.f32 %v25, %v56
    %vm59 = vcmask 254976
    %60 = vst.msk [vmem:[#allocation2] sm:$0x3] %vm59, %v58
    // Predicated region
    $region18: #{tpu_custom_call.1} parent=1 // pred_check
      %p61 = pneg %p15
    $region19: #{tpu_custom_call.1} parent=1 // pred_check_branch
      %63 = sbr.rel (%p61) target = $region21
    $region20: #{tpu_custom_call.1} parent=1 // pred_region
      %v64 = vld [vmem:[%s2] sm:$0x3]
      %v65 = vld [vmem:[#allocation2] sm:$0x3]
      %67 = vset.pattern.permute.xlu0 0
      %68 = vperm.xlu0 %67, %v64
      %v69 = vpop.permute.xlu0 %68
      %v71 = vmul.f32 %v65, %v69
      %72 = vst.msk [vmem:[#allocation3] sm:$0x3] %vm59, %v71
    $region21: #{tpu_custom_call.1} parent=1 // pred_fallthru
      _
    // Predicated region
    $region22: #{tpu_custom_call.1} parent=1 // pred_check
      _
    $region23: #{tpu_custom_call.1} parent=1 // pred_check_branch
      %74 = sbr.rel (0) target = $region25
    $region24: #{tpu_custom_call.1} parent=1 // pred_region
      %s76 = ssub.s32 32, 32
      %77 = vsyncadd [#allocation4], %s76
      %s79 = sshll.u32 [#allocation3], 4
      %s80 = int_to_ptr.vmem [resolvable:$true] %s79
      %82 = dma.vmem_to_hbm [thread:$0]  %s80, 32, %s3, [#allocation4]
    $region25: #{tpu_custom_call.1} parent=1 // pred_fallthru
      _
    // Predicated region
    $region26: #{tpu_custom_call.1} parent=1 // pred_check
      _
    $region27: #{tpu_custom_call.1} parent=1 // pred_check_branch
      %84 = sbr.rel (0) target = $region29
    $region28: #{tpu_custom_call.1} parent=1 // pred_region
      %85 = dma.done [#allocation4], 32
    $region29: #{tpu_custom_call.1} parent=1 // pred_fallthru
      _
    %86 = vsyncpa [#allocation4], 1

</llo_original>
